<compile_context>
chip_gen: v5e
topology: v5e:2x2
jax: 0.10.0
libtpu: 0.0.40
codegen_flags: <defaults>
</compile_context>

<pallas_src>
import jax
import jax.numpy as jnp
from jax.experimental import pallas as pl
from jax.experimental.pallas import tpu as pltpu


def _round_up(n, m):
    return (n + m - 1) // m * m


def binary_nn_kernel(x_ref, w1_ref, b1_ref, w2_ref, b2_ref, o_ref):
    # Layer 1 on the MXU: x streams in as f32 in natural (TILE_B, F) layout;
    # cast to bf16 in VMEM immediately before the matmul, accumulate in f32.
    xb = x_ref[...].astype(jnp.bfloat16)                               # (TILE_B, F)
    h = jnp.dot(xb, w1_ref[...], preferred_element_type=jnp.float32)   # (TILE_B, H) f32
    h = jnp.maximum(h + b1_ref[...], 0.0)                              # bias + ReLU (VPU, f32)
    # Layer 2 has output width 1 -> keep it OFF the MXU: VPU multiply by the
    # w2 row + cross-lane (XLU) reduction over the hidden axis.
    y = jnp.sum(h * w2_ref[...], axis=-1, keepdims=True)               # (TILE_B, 1)
    y = y + b2_ref[0, 0]                                               # scalar bias from SMEM
    o_ref[...] = jax.nn.sigmoid(y).astype(o_ref.dtype)


def _choose_tile_b(B, F, H):
    """Batch-tile heuristic: ~1 MiB of streamed f32 x per grid step,
    capped by a conservative VMEM budget (safe on v7x's 64 MiB / 32 MiB
    scoped default; v5e/v6e have 128 MiB so this never binds there)."""
    target = max(128, ((1 << 20) // (F * 4)) // 128 * 128)
    tile_b = max(8, min(target, _round_up(max(B, 1), 8)))

    vmem_budget = 24 << 20  # leave headroom under v7x scoped VMEM

    def streamed_bytes(tb):
        # double-buffered f32 x tile + (TILE_B, H) f32 intermediate + 2x f32 out
        # NOTE: for very large H one would chunk the hidden axis in-kernel
        # (fori_loop over H-slices) instead of shrinking tile_b; with the
        # module's default H=32 shrinking tile_b is the simpler, equivalent cap.
        return 2 * tb * F * 4 + tb * H * 4 + 2 * tb * 4

    while tile_b > 8 and streamed_bytes(tile_b) > vmem_budget:
        tile_b = max(8, (tile_b // 2) // 8 * 8)

    # Prefer >=2 grid steps so ("parallel",) actually shards the batch across
    # v7x's two TensorCores instead of collapsing to grid=(1,).
    while tile_b > 256 and pl.cdiv(B, tile_b) < 2 <= pl.cdiv(B, tile_b // 2):
        tile_b = max(8, (tile_b // 2) // 8 * 8)
    return tile_b


def binary_nn_forward(x, w1, b1, w2, b2, *, tile_b=None):
    """sigmoid(relu(x @ w1 + b1) @ w2 + b2).

    x : (B, F) float32
    w1: (F, H)   b1: (H,) or (1, H)
    w2: (H, 1)   b2: scalar-shaped (1, 1) / (1,) / ()
    returns (B, 1) float32 probabilities.
    """
    B, F = x.shape
    H = w1.shape[1]

    if tile_b is None:
        tile_b = _choose_tile_b(B, F, H)
    b_pad = _round_up(max(B, 1), tile_b)

    # x keeps its natural (B, F) f32 layout -- no wrapper transpose / cast.
    # Only pad the batch up to a tile multiple when needed.
    if b_pad != B:
        x = jnp.pad(x, ((0, b_pad - B), (0, 0)))

    w1b = jnp.asarray(w1, jnp.bfloat16)                  # (F, H) bf16, VMEM-resident
    b1r = jnp.asarray(b1, jnp.float32).reshape(1, H)     # (1, H) f32
    w2r = jnp.asarray(w2, jnp.float32).reshape(1, H)     # (1, H) f32 (row layout)
    b2s = jnp.asarray(b2, jnp.float32).reshape(1, 1)     # (1, 1) f32 -> SMEM

    # Constant index_map weight: single-buffer it only when the default
    # double-buffer footprint would matter (big F*H) -- relevant on v7x.
    if 2 * F * H * 2 > (8 << 20):
        w1_spec = pl.BlockSpec((F, H), lambda i: (0, 0), pipeline_mode=pl.Buffered(1))
    else:
        w1_spec = pl.BlockSpec((F, H), lambda i: (0, 0))

    grid = (b_pad // tile_b,)
    cost = pl.CostEstimate(
        flops=2 * b_pad * F * H + 2 * b_pad * H,
        transcendentals=b_pad,                                  # sigmoid
        bytes_accessed=b_pad * F * 4 + F * H * 2 + 2 * H * 4 + b_pad * 4,
    )

    out = pl.pallas_call(
        binary_nn_kernel,
        out_shape=jax.ShapeDtypeStruct((b_pad, 1), jnp.float32),
        grid=grid,
        in_specs=[
            pl.BlockSpec((tile_b, F), lambda i: (i, 0)),         # x: streamed, natural layout
            w1_spec,                                             # w1: resident
            pl.BlockSpec((1, H), lambda i: (0, 0)),              # b1: resident
            pl.BlockSpec((1, H), lambda i: (0, 0)),              # w2: resident
            pl.BlockSpec(memory_space=pltpu.MemorySpace.SMEM),   # b2: scalar
        ],
        out_specs=pl.BlockSpec((tile_b, 1), lambda i: (i, 0)),
        compiler_params=pltpu.CompilerParams(
            dimension_semantics=("parallel",),   # megacore sharding on v7x
        ),
        cost_estimate=cost,
    )(x, w1b, b1r, w2r, b2s)

    return out[:B]


def _reference(x, w1, b1, w2, b2):
    h = jnp.maximum(x @ w1 + jnp.asarray(b1, jnp.float32).reshape(1, -1), 0.0)
    return jax.nn.sigmoid(h @ jnp.asarray(w2, jnp.float32).reshape(-1, 1)
                          + jnp.asarray(b2, jnp.float32).reshape(1, 1))


if __name__ == "__main__":
    # Deterministic synthetic parameters / inputs (small demo shapes).
    n_features = 16
    n_hidden = 32
    batch = 8

    key = jax.random.PRNGKey(0)
    kx, kw1, kb1, kw2, kb2, kx2 = jax.random.split(key, 6)

    x = jax.random.normal(kx, (batch, n_features), dtype=jnp.float32)
    # Kernel-layout weights (torch Linear stores (out, in); we store (in, out)).
    w1 = jax.random.normal(kw1, (n_features, n_hidden), dtype=jnp.float32) * 0.1
    b1 = jax.random.normal(kb1, (1, n_hidden), dtype=jnp.float32) * 0.1
    w2 = jax.random.normal(kw2, (n_hidden, 1), dtype=jnp.float32) * 0.1
    b2 = jax.random.normal(kb2, (1, 1), dtype=jnp.float32) * 0.1

    out = jax.block_until_ready(binary_nn_forward(x, w1, b1, w2, b2))
    ref = _reference(x, w1, b1, w2, b2)
    assert out.shape == (batch, 1)
    assert jnp.allclose(out, ref, atol=1e-2, rtol=1e-2), float(
        jnp.max(jnp.abs(out - ref))
    )

    # Second check: multi-step grid + batch padding (ragged B, explicit tile).
    batch2 = 300
    x2 = jax.random.normal(kx2, (batch2, n_features), dtype=jnp.float32)
    out2 = jax.block_until_ready(binary_nn_forward(x2, w1, b1, w2, b2, tile_b=128))
    ref2 = _reference(x2, w1, b1, w2, b2)
    assert out2.shape == (batch2, 1)
    assert jnp.allclose(out2, ref2, atol=1e-2, rtol=1e-2), float(
        jnp.max(jnp.abs(out2 - ref2))
    )

    print("KERNEL_OK")
</pallas_src>

<mosaic_0001>
module attributes {stable_mosaic.version = 11 : i64} {
  func.func @binary_nn_kernel(%arg0: i32, %arg1: memref<8x16xf32, #tpu.memory_space<vmem>>, %arg2: memref<16x32xbf16, #tpu.memory_space<vmem>>, %arg3: memref<1x32xf32, #tpu.memory_space<vmem>>, %arg4: memref<1x32xf32, #tpu.memory_space<vmem>>, %arg5: memref<1x1xf32, #tpu.memory_space<smem>>, %arg6: memref<8x1xf32, #tpu.memory_space<vmem>>) attributes {dimension_semantics = [#tpu.dimension_semantics<parallel>], iteration_bounds = array<i64: 1>, scalar_prefetch = 0 : i64, scratch_operands = 0 : i64, tpu.core_type = #tpu.core_type<tc>, window_params = [{transform_indices = @transform_0, window_bounds = array<i64: 8, 16>}, {pipeline_mode = #tpu.pipeline_mode<synchronous>, transform_indices = @transform_1, window_bounds = array<i64: 16, 32>}, {pipeline_mode = #tpu.pipeline_mode<synchronous>, transform_indices = @transform_2, window_bounds = array<i64: 1, 32>}, {pipeline_mode = #tpu.pipeline_mode<synchronous>, transform_indices = @transform_3, window_bounds = array<i64: 1, 32>}, {transform_indices = @transform_4, window_bounds = array<i64: 1, 1>}, {transform_indices = @transform_5, window_bounds = array<i64: 8, 1>}]} {
    %c0 = arith.constant 0 : index
    %c0_0 = arith.constant 0 : index
    %0 = vector.load %arg1[%c0, %c0_0] : memref<8x16xf32, #tpu.memory_space<vmem>>, vector<8x16xf32>
    %1 = arith.truncf %0 : vector<8x16xf32> to vector<8x16xbf16>
    %c0_1 = arith.constant 0 : index
    %c0_2 = arith.constant 0 : index
    %2 = vector.load %arg2[%c0_1, %c0_2] : memref<16x32xbf16, #tpu.memory_space<vmem>>, vector<16x32xbf16>
    %cst = arith.constant dense<0.000000e+00> : vector<8x32xf32>
    %3 = tpu.matmul %1, %2, %cst {dimension_numbers = #tpu.dot_dimension_numbers<[1], [0], [0], [1], [0, 0, 1, 1], [], []>} : vector<8x16xbf16>, vector<16x32xbf16>, vector<8x32xf32> -> vector<8x32xf32>
    %c0_3 = arith.constant 0 : index
    %c0_4 = arith.constant 0 : index
    %4 = vector.load %arg3[%c0_3, %c0_4] : memref<1x32xf32, #tpu.memory_space<vmem>>, vector<1x32xf32>
    %5 = vector.broadcast %4 : vector<1x32xf32> to vector<8x32xf32>
    %6 = arith.addf %3, %5 : vector<8x32xf32>
    %cst_5 = arith.constant 0.000000e+00 : f32
    %7 = vector.broadcast %cst_5 : f32 to vector<8x32xf32>
    %8 = arith.maximumf %6, %7 : vector<8x32xf32>
    %c0_6 = arith.constant 0 : index
    %c0_7 = arith.constant 0 : index
    %9 = vector.load %arg4[%c0_6, %c0_7] : memref<1x32xf32, #tpu.memory_space<vmem>>, vector<1x32xf32>
    %10 = vector.broadcast %9 : vector<1x32xf32> to vector<8x32xf32>
    %11 = arith.mulf %8, %10 : vector<8x32xf32>
    %cst_8 = arith.constant dense<0.000000e+00> : vector<8xf32>
    %12 = vector.multi_reduction <add>, %11, %cst_8 [1] : vector<8x32xf32> to vector<8xf32>
    %13 = vector.shape_cast %12 : vector<8xf32> to vector<8x1xf32>
    %c0_9 = arith.constant 0 : index
    %c0_10 = arith.constant 0 : index
    %14 = memref.load %arg5[%c0_9, %c0_10] : memref<1x1xf32, #tpu.memory_space<smem>>
    %15 = vector.broadcast %14 : f32 to vector<8x1xf32>
    %16 = arith.addf %13, %15 : vector<8x1xf32>
    %17 = arith.negf %16 : vector<8x1xf32>
    %18 = math.exp %17 : vector<8x1xf32>
    %cst_11 = arith.constant 1.000000e+00 : f32
    %19 = vector.broadcast %cst_11 : f32 to vector<8x1xf32>
    %20 = arith.addf %19, %18 : vector<8x1xf32>
    %21 = arith.divf %19, %20 : vector<8x1xf32>
    %c0_12 = arith.constant 0 : index
    %c0_13 = arith.constant 0 : index
    %22 = vector.load %arg6[%c0_12, %c0_13] : memref<8x1xf32, #tpu.memory_space<vmem>>, vector<8x1xf32>
    tpu.vector_store %arg6[%c0_12, %c0_13], %21 {strides = array<i32>} : memref<8x1xf32, #tpu.memory_space<vmem>>, vector<8x1xf32>,
    return
  }
  func.func @transform_0(%arg0: i32) -> (i32, i32) {
    %c0_i32 = arith.constant 0 : i32
    %c0_i32_0 = arith.constant 0 : i32
    return %arg0, %c0_i32 : i32, i32
  }
  func.func @transform_1(%arg0: i32) -> (i32, i32) {
    %c0_i32 = arith.constant 0 : i32
    %c0_i32_0 = arith.constant 0 : i32
    %c0_i32_1 = arith.constant 0 : i32
    return %c0_i32, %c0_i32_0 : i32, i32
  }
  func.func @transform_2(%arg0: i32) -> (i32, i32) {
    %c0_i32 = arith.constant 0 : i32
    %c0_i32_0 = arith.constant 0 : i32
    %c0_i32_1 = arith.constant 0 : i32
    return %c0_i32, %c0_i32_0 : i32, i32
  }
  func.func @transform_3(%arg0: i32) -> (i32, i32) {
    %c0_i32 = arith.constant 0 : i32
    %c0_i32_0 = arith.constant 0 : i32
    %c0_i32_1 = arith.constant 0 : i32
    return %c0_i32, %c0_i32_0 : i32, i32
  }
  func.func @transform_4(%arg0: i32) -> (i32, i32) {
    %c0_i32 = arith.constant 0 : i32
    %c0_i32_0 = arith.constant 0 : i32
    %c0_i32_1 = arith.constant 0 : i32
    return %c0_i32, %c0_i32_0 : i32, i32
  }
  func.func @transform_5(%arg0: i32) -> (i32, i32) {
    %c0_i32 = arith.constant 0 : i32
    %c0_i32_0 = arith.constant 0 : i32
    return %arg0, %c0_i32 : i32, i32
  }
}

</mosaic_0001>

<llo_original>
// kernel: tpu_custom_call.1
$region0: #{tpu_custom_call.1}
  #allocation0 [shape = 'u32[]', space=smem, size = 0x4, offset = 0x4, fixed_abs, tag = 'smem constant byte address 0x4 - core index']
  #allocation1 [shape = 'u32[72,128]{1,0:T(1,128)}', space=vmem, size = 0x9000, scoped, tag = 'internal scratch']
  #allocation2 [shape = 'f32[1,1]{1,0:T(1,128)S(6)}', space=smem, size = 0x200, scoped, tag = 'scoped memory for tpu_custom_call.1']
  %s0 = inlined_call_operand.hbm [shape: f32[8,16], index: 0, kind: input, shape index: {}]
  %s1 = inlined_call_operand.hbm [shape: bf16[16,32], index: 1, kind: input, shape index: {}]
  %s2 = inlined_call_operand.vmem [shape: f32[1,32], index: 2, kind: input, shape index: {}]
  %s3 = inlined_call_operand.vmem [shape: f32[1,32], index: 3, kind: input, shape index: {}]
  %s4 = inlined_call_operand.<no memory space> [shape: f32[1,1], index: 4, kind: input, shape index: {}]
  %s5 = inlined_call_operand.vmem [shape: f32[8,1], index: 5, kind: output, shape index: {}]
  %s6 = sld [smem:[#allocation0]]
  $region38: #{tpu_custom_call.1} parent=0
    _
  %s8 = ssub.s32 1, %s6
  %s9 = scalar_select 0, %s8, %s6
  %10 = sst [smem:[#allocation2]] %s4
  $region1: #{tpu_custom_call.1} parent=0
    #allocation3 [shape = 'u8[4096]{0}', space=vmem, size = 0x1000, scoped, tag = 'input window, operand 0, single buffered']
    #allocation4 [shape = 's32[1]{0}', space=sflag, size = 0x4, scoped, tag = 'scoped memory for tpu_custom_call.1']
    #allocation5 [shape = 'u8[4096]{0}', space=vmem, size = 0x1000, scoped, tag = 'input window, operand 1, single buffered']
    #allocation6 [shape = 's32[1]{0}', space=sflag, size = 0x4, scoped, tag = 'scoped memory for tpu_custom_call.1']
    %11 = vsyncpa [#allocation4], 0
    %12 = vsyncpa [#allocation6], 0
    // Predicated region
    $region2: #{tpu_custom_call.1} parent=1 // pred_check
      _
    $region3: #{tpu_custom_call.1} parent=1 // pred_check_branch
      %14 = sbr.rel (0) target = $region5
    $region4: #{tpu_custom_call.1} parent=1 // pred_region
      %16 = vsyncadd [#allocation4], 0
      %s18 = sshll.u32 %s0, 4
      %s19 = int_to_ptr.hbm [resolvable:$true] %s18
      %s20 = sshll.u32 [#allocation3], 4
      %s21 = int_to_ptr.vmem [resolvable:$true] %s20
      %23 = dma.hbm_to_vmem [thread:$0]  %s19, 128, %s21, [#allocation4]
    $region5: #{tpu_custom_call.1} parent=1 // pred_fallthru
      _
    // Predicated region
    $region6: #{tpu_custom_call.1} parent=1 // pred_check
      _
    $region7: #{tpu_custom_call.1} parent=1 // pred_check_branch
      %25 = sbr.rel (0) target = $region9
    $region8: #{tpu_custom_call.1} parent=1 // pred_region
      %27 = vsyncadd [#allocation6], 0
      %s28 = sshll.u32 %s1, 4
      %s29 = int_to_ptr.hbm [resolvable:$true] %s28
      %s30 = sshll.u32 [#allocation5], 4
      %s31 = int_to_ptr.vmem [resolvable:$true] %s30
      %36 = dma.hbm_to_vmem [thread:$0]  %s29, 128, %s31, [#allocation6], 64, 64, 4
    $region9: #{tpu_custom_call.1} parent=1 // pred_fallthru
      _
    // Predicated region
    $region10: #{tpu_custom_call.1} parent=1 // pred_check
      _
    $region11: #{tpu_custom_call.1} parent=1 // pred_check_branch
      %38 = sbr.rel (0) target = $region13
    $region12: #{tpu_custom_call.1} parent=1 // pred_region
      _
    $region13: #{tpu_custom_call.1} parent=1 // pred_fallthru
      _
    // Predicated region
    $region14: #{tpu_custom_call.1} parent=1 // pred_check
      _
    $region15: #{tpu_custom_call.1} parent=1 // pred_check_branch
      %40 = sbr.rel (0) target = $region17
    $region16: #{tpu_custom_call.1} parent=1 // pred_region
      _
    $region17: #{tpu_custom_call.1} parent=1 // pred_fallthru
      _
    // Predicated region
    $region18: #{tpu_custom_call.1} parent=1 // pred_check
      _
    $region19: #{tpu_custom_call.1} parent=1 // pred_check_branch
      %42 = sbr.rel (0) target = $region21
    $region20: #{tpu_custom_call.1} parent=1 // pred_region
      _
    $region21: #{tpu_custom_call.1} parent=1 // pred_fallthru
      _
    // Predicated region
    $region22: #{tpu_custom_call.1} parent=1 // pred_check
      _
    $region23: #{tpu_custom_call.1} parent=1 // pred_check_branch
      %44 = sbr.rel (0) target = $region25
    $region24: #{tpu_custom_call.1} parent=1 // pred_region
      %46 = dma.done [#allocation4], 128
    $region25: #{tpu_custom_call.1} parent=1 // pred_fallthru
      _
    // Predicated region
    $region26: #{tpu_custom_call.1} parent=1 // pred_check
      _
    $region27: #{tpu_custom_call.1} parent=1 // pred_check_branch
      %48 = sbr.rel (0) target = $region29
    $region28: #{tpu_custom_call.1} parent=1 // pred_region
      %50 = dma.done [#allocation6], 128
    $region29: #{tpu_custom_call.1} parent=1 // pred_fallthru
      _
    %v52 = vld [vmem:[#allocation3] sm:$0xff]
    %v53 = vpack.c.bf16 %v52, %v52
    %v54 = vld [vmem:[#allocation5] sm:$0xf]
    %v55 = vld [vmem:[#allocation5 + $0x4] sm:$0xf]
    %v56 = vld [vmem:[%s2] sm:$0x1]
    %v58 = vperm.slane %v56, 0
    %v62 = vunpack.c.l.b16 %v54
    %v63 = vunpack.c.l.b16 %v55
    %v64 = vpack.c.b16 %v63, %v62
    %vm66 = vcmask 130048
    %v68 = vsel %vm66, %v53, 0
    %70 = vmatpush.bf16.msra.mxu0 0
    %71 = vmatpush.bf16.msra.mxu0 0
    %72 = vmatpush.bf16.msra.mxu0 0
    %73 = vmatpush.bf16.msra.mxu0 0
    %74 = vmatpush.bf16.msra.mxu0 0
    %75 = vmatpush.bf16.msra.mxu0 0
    %76 = vmatpush.bf16.msra.mxu0 0
    %77 = vmatpush.bf16.msra.mxu0 %v64
    %78 = vmatmul.bf16.gmra.mxu0 %v68
    %v79 = vpop.f32.mrf.mxu0
    %v80 = vadd.f32 %v58, %v79
    %v81 = vpop.f32.mrf.mxu0
    %82 = vdwg.mxu0
    %v83 = vmax.f32 %v80, 0.0
    %v84 = vld [vmem:[%s3] sm:$0x1]
    %v86 = vperm.slane %v84, 0
    %v88 = vmul.f32 %v83, %v86
    %vm89 = vcmask 261120
    %v90 = vsel %vm89, %v88, 0.0
    %91 = vadd.xlane.f32.xlu0 %v90
    %v92 = vpop.xlane.xlu0 %91
    %s93 = sld [smem:[#allocation2]]
    %v94 = vstv %s93
    %v95 = vadd.f32 %v92, %v94
    %v96 = vxor.u32 %v95, 2147483648
    %v97 = vmul.f32 %v96, 1.442695
    %v98 = vpow.pop %v97
    %v99 = vadd.f32 %v98, 1.0
    %v100 = vrcp.pop %v99
    %v101 = vmul.f32 %v99, %v100
    %v102 = vsub.f32 1.0, %v101
    %v103 = vmul.f32 %v100, %v102
    %v104 = vadd.f32 %v100, %v103
    %vm105 = vweird.f32 %v99
    %vm106 = vweird.f32 %v100
    %vm107 = vmor %vm105, %vm106
    %v108 = vsel %vm107, %v100, %v104
    %v109 = vand.u32 2147483647, %v99
    %vm110 = vcmp.eq.f32.partialorder %v109, 8.507059e+37
    %v111 = vand.u32 %v99, 2147483648
    %v112 = vor.u32 1.1754944e-38, %v111
    %v113 = vsel %vm110, %v112, %v108
    %v114 = vmul.f32 1.0, %v113
    %vm115 = vcmask 7168
    %116 = vst.msk [vmem:[%s5] sm:$0xff] %vm115, %v114
    // Predicated region
    $region30: #{tpu_custom_call.1} parent=1 // pred_check
      _
    $region31: #{tpu_custom_call.1} parent=1 // pred_check_branch
      %118 = sbr.rel (0) target = $region33
    $region32: #{tpu_custom_call.1} parent=1 // pred_region
      _
    $region33: #{tpu_custom_call.1} parent=1 // pred_fallthru
      _
    // Predicated region
    $region34: #{tpu_custom_call.1} parent=1 // pred_check
      _
    $region35: #{tpu_custom_call.1} parent=1 // pred_check_branch
      %120 = sbr.rel (0) target = $region37
    $region36: #{tpu_custom_call.1} parent=1 // pred_region
      _
    $region37: #{tpu_custom_call.1} parent=1 // pred_fallthru
      _
    %121 = vsyncpa [#allocation4], 1
    %122 = vsyncpa [#allocation6], 1

</llo_original>
